<compile_context>
chip_gen: v5e
topology: v5e:2x2
jax: 0.10.0
libtpu: 0.0.40
codegen_flags: <defaults>
</compile_context>

<pallas_src>
import functools

import jax
import jax.numpy as jnp
from jax.experimental import pallas as pl
from jax.experimental.pallas import tpu as pltpu

LEAKY_SLOPE = 0.01  # PyTorch nn.LeakyReLU default negative_slope


# -----------------------------------------------------------------------------
# Hardware / budget helpers
# -----------------------------------------------------------------------------
def _vmem_capacity_bytes():
    try:
        info = pltpu.get_tpu_info()
        cap = getattr(info, "vmem_capacity_bytes", None)
        if cap:
            return int(cap)
    except Exception:
        pass
    return 64 << 20  # conservative (v7x-class) default if the query fails


def _vmem_budget():
    """Per-generation (vmem_limit_cap, max_block_bytes, target_block_bytes)."""
    cap = _vmem_capacity_bytes()
    if cap <= (64 << 20):
        # v7x-class: 64 MiB physical VMEM per TensorCore.  Leave ~16 MiB headroom
        # for compiler scratch, semaphores and double-buffered weight tiles.
        return 48 << 20, 10 << 20, 8 << 20
    # v5e / v6e: 128 MiB physical VMEM; default scoped limit is far lower, so an
    # explicit vmem_limit_bytes is required anyway.
    return 96 << 20, 20 << 20, 16 << 20


def _vmem_limit(need_bytes, cap_bytes):
    return int(min(max(need_bytes, 16 << 20), cap_bytes))


def _pick_nb(n, per_batch_bytes, target_block_bytes):
    """Largest divisor of n whose (nb, C, HW) block fits the target.

    Keeps >= 2 grid steps per TensorCore when n allows it (v7x shards a
    "parallel" grid over 2 TCs; with only 1 step/core the block DMA is fully
    exposed, so we cap nb at n//4 when n >= 4, else n//2).
    """
    max_nb = max(1, target_block_bytes // max(1, per_batch_bytes))
    if n >= 4:
        max_nb = min(max_nb, n // 4)
    elif n >= 2:
        max_nb = min(max_nb, n // 2)
    max_nb = max(1, min(max_nb, n))
    for nb in range(int(max_nb), 0, -1):
        if n % nb == 0:
            return nb
    return 1


def _largest_hw_tile(hw, c, itemsize, max_block_bytes):
    """Largest t with t % 128 == 0, hw % t == 0 and c*t*itemsize <= max_block_bytes."""
    max_t = max_block_bytes // max(1, c * itemsize)
    t = (min(max_t, hw) // 128) * 128
    while t >= 128:
        if hw % t == 0:
            return t
        t -= 128
    return None


# -----------------------------------------------------------------------------
# Kernels
# -----------------------------------------------------------------------------
def _fc_gate(avg, mx, w1t, w2t):
    """sigmoid(fc(avg) + fc(mx)); fc = (C->C//r) matmul -> LeakyReLU -> (C//r->C) matmul."""
    def fc(v):
        h = jnp.dot(v, w1t, preferred_element_type=jnp.float32)
        h = jnp.where(h > 0, h, LEAKY_SLOPE * h)          # LeakyReLU(0.01)
        return jnp.dot(h, w2t, preferred_element_type=jnp.float32)
    return jax.nn.sigmoid(fc(avg) + fc(mx))


# ---- fused path: one block holds NB whole images -----------------------------
def _ca_fused_kernel(x_ref, w1t_ref, w2t_ref, o_ref, *, inv_hw):
    x = x_ref[...]                                         # (NB, C, HW)
    # f32 accumulation for the mean (bf16-safe); max reduces in the input dtype,
    # only the tiny (NB, C) result is cast.
    avg = jnp.sum(x, axis=2, dtype=jnp.float32) * inv_hw   # (NB, C)
    mx = jnp.max(x, axis=2).astype(jnp.float32)            # (NB, C)
    gate = _fc_gate(avg, mx, w1t_ref[...], w2t_ref[...])   # (NB, C) f32
    o_ref[...] = (x * gate[:, :, None].astype(x.dtype)).astype(o_ref.dtype)


# ---- split path (large C*HW): tiled pooling+gate kernel, then scale kernel ----
def _ca_gate_kernel(x_ref, w1t_ref, w2t_ref, gate_ref, sum_acc, max_acc, *, inv_hw):
    t = pl.program_id(1)

    @pl.when(t == 0)
    def _():
        sum_acc[...] = jnp.zeros_like(sum_acc)
        max_acc[...] = jnp.full_like(max_acc, -jnp.inf)

    x = x_ref[...]                                         # (1, C, THW)
    sum_acc[...] += jnp.sum(x, axis=2, dtype=jnp.float32)
    max_acc[...] = jnp.maximum(max_acc[...], jnp.max(x, axis=2).astype(jnp.float32))

    @pl.when(t == pl.num_programs(1) - 1)
    def _():
        gate = _fc_gate(sum_acc[...] * inv_hw, max_acc[...],
                        w1t_ref[...], w2t_ref[...])        # (1, C) f32
        gate_ref[...] = gate[:, :, None]                   # (1, C, 1)


def _ca_scale_kernel(x_ref, gate_ref, o_ref):
    g = gate_ref[...].astype(x_ref.dtype)                  # (1, C, 1)
    o_ref[...] = (x_ref[...] * g).astype(o_ref.dtype)


# -----------------------------------------------------------------------------
# pallas_call wrappers
# -----------------------------------------------------------------------------
def _run_fused(x2, w1t, w2t, nb, inv_hw, vmem_cap, weight_bytes):
    N, C, HW = x2.shape
    Cr = w1t.shape[1]
    itemsize = jnp.dtype(x2.dtype).itemsize
    block_bytes = nb * C * HW * itemsize
    vmem_need = 4 * block_bytes + 4 * weight_bytes + (2 << 20)
    cost = pl.CostEstimate(
        flops=int(4 * N * C * HW + 8 * N * C * Cr),
        transcendentals=int(2 * N * C),
        bytes_accessed=int(2 * N * C * HW * itemsize + 2 * weight_bytes),
    )
    return pl.pallas_call(
        functools.partial(_ca_fused_kernel, inv_hw=inv_hw),
        out_shape=jax.ShapeDtypeStruct((N, C, HW), x2.dtype),
        grid_spec=pltpu.PrefetchScalarGridSpec(
            num_scalar_prefetch=0,
            grid=(N // nb,),
            in_specs=[
                pl.BlockSpec((nb, C, HW), lambda b: (b, 0, 0)),
                pl.BlockSpec((C, Cr), lambda b: (0, 0)),
                pl.BlockSpec((Cr, C), lambda b: (0, 0)),
            ],
            out_specs=pl.BlockSpec((nb, C, HW), lambda b: (b, 0, 0)),
        ),
        compiler_params=pltpu.CompilerParams(
            dimension_semantics=("parallel",),
            vmem_limit_bytes=_vmem_limit(vmem_need, vmem_cap),
        ),
        cost_estimate=cost,
    )(x2, w1t, w2t)


def _run_split(x2, w1t, w2t, thw, inv_hw, vmem_cap, weight_bytes):
    N, C, HW = x2.shape
    Cr = w1t.shape[1]
    itemsize = jnp.dtype(x2.dtype).itemsize
    n_hw = HW // thw
    block_bytes = C * thw * itemsize

    # Phase 1: HW-tiled pooling (f32 sum + running max) -> fc -> sigmoid gate.
    gate_cost = pl.CostEstimate(
        flops=int(3 * N * C * HW + 8 * N * C * Cr),
        transcendentals=int(2 * N * C),
        bytes_accessed=int(N * C * HW * itemsize + 2 * weight_bytes + 4 * N * C),
    )
    gate = pl.pallas_call(
        functools.partial(_ca_gate_kernel, inv_hw=inv_hw),
        out_shape=jax.ShapeDtypeStruct((N, C, 1), jnp.float32),
        grid_spec=pltpu.PrefetchScalarGridSpec(
            num_scalar_prefetch=0,
            grid=(N, n_hw),
            in_specs=[
                pl.BlockSpec((1, C, thw), lambda b, t: (b, 0, t)),
                pl.BlockSpec((C, Cr), lambda b, t: (0, 0)),
                pl.BlockSpec((Cr, C), lambda b, t: (0, 0)),
            ],
            out_specs=pl.BlockSpec((1, C, 1), lambda b, t: (b, 0, 0)),
            scratch_shapes=[
                pltpu.VMEM((1, C), jnp.float32),   # sum accumulator
                pltpu.VMEM((1, C), jnp.float32),   # running max
            ],
        ),
        compiler_params=pltpu.CompilerParams(
            dimension_semantics=("parallel", "arbitrary"),
            vmem_limit_bytes=_vmem_limit(
                2 * block_bytes + 4 * weight_bytes + (2 << 20), vmem_cap),
        ),
        cost_estimate=gate_cost,
    )(x2, w1t, w2t)

    # Phase 2: y = x * gate (second lane-dense sweep over x).
    scale_cost = pl.CostEstimate(
        flops=int(N * C * HW),
        transcendentals=0,
        bytes_accessed=int(2 * N * C * HW * itemsize + 4 * N * C),
    )
    return pl.pallas_call(
        _ca_scale_kernel,
        out_shape=jax.ShapeDtypeStruct((N, C, HW), x2.dtype),
        grid_spec=pltpu.PrefetchScalarGridSpec(
            num_scalar_prefetch=0,
            grid=(N, n_hw),
            in_specs=[
                pl.BlockSpec((1, C, thw), lambda b, t: (b, 0, t)),
                pl.BlockSpec((1, C, 1), lambda b, t: (b, 0, 0)),
            ],
            out_specs=pl.BlockSpec((1, C, thw), lambda b, t: (b, 0, t)),
        ),
        compiler_params=pltpu.CompilerParams(
            dimension_semantics=("parallel", "parallel"),
            vmem_limit_bytes=_vmem_limit(4 * block_bytes + (2 << 20), vmem_cap),
        ),
        cost_estimate=scale_cost,
    )(x2, gate)


def channel_attention(x, w1, w2, *, target_block_bytes=None, max_block_bytes=None):
    """ChannelAttention forward.

    x:  (N, C, H, W)
    w1: (C//r, C) = fc[0].weight[:, :, 0, 0]   (1x1 conv, bias=False)
    w2: (C, C//r) = fc[2].weight[:, :, 0, 0]
    """
    N, C, H, W = x.shape
    HW = H * W
    x2 = x.reshape(N, C, HW)
    itemsize = jnp.dtype(x2.dtype).itemsize
    inv_hw = 1.0 / HW

    # Pre-transpose the 1x1-conv weights so the kernels need no transposes.
    w1t = jnp.asarray(w1, jnp.float32).T   # (C, C//r)
    w2t = jnp.asarray(w2, jnp.float32).T   # (C//r, C)
    weight_bytes = (w1t.size + w2t.size) * 4

    vmem_cap, gen_max_block, gen_target = _vmem_budget()
    if max_block_bytes is None:
        max_block_bytes = gen_max_block
    if target_block_bytes is None:
        target_block_bytes = gen_target

    # Guarantee 4 * block + weights + headroom fits the generation's VMEM cap.
    avail_for_blocks = max(vmem_cap - 4 * weight_bytes - (2 << 20), 4 << 20)
    max_block_bytes = min(max_block_bytes, avail_for_blocks // 4)
    target_block_bytes = min(target_block_bytes, max_block_bytes)

    per_batch_bytes = C * HW * itemsize

    if per_batch_bytes <= max_block_bytes:
        # Fused path: pool + fc + scale in a single sweep over x.
        nb = _pick_nb(N, per_batch_bytes, target_block_bytes)
        out = _run_fused(x2, w1t, w2t, nb, inv_hw, vmem_cap, weight_bytes)
        return out.reshape(N, C, H, W)

    # Split path: single-image (C, HW) block exceeds the budget -> tiled pooling
    # into scratch accumulators, gate emitted on the last tile, then a second
    # sweep applies y = x * gate.
    thw = _largest_hw_tile(HW, C, itemsize, max_block_bytes)
    if thw is None:
        # TODO(synk): HW has no 128-aligned divisor that fits the VMEM budget;
        # best-effort single-batch fused fallback (may spill for very large C*HW).
        out = _run_fused(x2, w1t, w2t, 1, inv_hw, vmem_cap, weight_bytes)
        return out.reshape(N, C, H, W)

    out = _run_split(x2, w1t, w2t, thw, inv_hw, vmem_cap, weight_bytes)
    return out.reshape(N, C, H, W)


# -----------------------------------------------------------------------------
# Pure-JAX reference mirroring the PyTorch forward
# -----------------------------------------------------------------------------
def reference(x, w1, w2):
    avg = jnp.mean(x, axis=(2, 3))              # (N, C)
    mx = jnp.max(x, axis=(2, 3))                # (N, C)

    def fc(v):
        h = v @ w1.T
        h = jnp.where(h > 0, h, LEAKY_SLOPE * h)
        return h @ w2.T

    gate = jax.nn.sigmoid(fc(avg) + fc(mx))     # (N, C)
    return x * gate[:, :, None, None]


if __name__ == "__main__":
    # Small shapes consistent with the module: channel=32, reduction=16 -> hidden=2.
    N, C, H, W = 2, 32, 16, 16
    reduction = 16
    Cr = C // reduction

    key = jax.random.PRNGKey(0)
    kx, k1, k2 = jax.random.split(key, 3)
    x = jax.random.normal(kx, (N, C, H, W), dtype=jnp.float32)
    # Deterministic synthetic 1x1-conv weights (bias=False) viewed as matrices.
    w1 = 0.1 * jax.random.normal(k1, (Cr, C), dtype=jnp.float32)   # fc[0].weight[:, :, 0, 0]
    w2 = 0.1 * jax.random.normal(k2, (C, Cr), dtype=jnp.float32)   # fc[2].weight[:, :, 0, 0]

    y_ref = reference(x, w1, w2)

    # Fused (default) path.
    y = channel_attention(x, w1, w2)
    jax.block_until_ready(y)
    assert y.shape == (N, C, H, W)
    assert jnp.allclose(y, y_ref, atol=1e-5, rtol=1e-5), "fused path mismatch vs reference"

    # Split (tiled pooling + scale) path, force-triggered with a tiny block budget.
    y_split = channel_attention(x, w1, w2, max_block_bytes=16 * 1024)
    jax.block_until_ready(y_split)
    assert jnp.allclose(y_split, y_ref, atol=1e-5, rtol=1e-5), "split path mismatch vs reference"

    print("KERNEL_OK")
</pallas_src>

<mosaic_0001>
module attributes {stable_mosaic.version = 11 : i64} {
  func.func @_ca_fused_kernel(%arg0: i32, %arg1: memref<1x32x256xf32, #tpu.memory_space<vmem>>, %arg2: memref<32x2xf32, #tpu.memory_space<vmem>>, %arg3: memref<2x32xf32, #tpu.memory_space<vmem>>, %arg4: memref<1x32x256xf32, #tpu.memory_space<vmem>>) attributes {dimension_semantics = [#tpu.dimension_semantics<parallel>], iteration_bounds = array<i64: 2>, scalar_prefetch = 0 : i64, scratch_operands = 0 : i64, tpu.core_type = #tpu.core_type<tc>, window_params = [{transform_indices = @transform_0, window_bounds = array<i64: 1, 32, 256>}, {pipeline_mode = #tpu.pipeline_mode<synchronous>, transform_indices = @transform_1, window_bounds = array<i64: 32, 2>}, {pipeline_mode = #tpu.pipeline_mode<synchronous>, transform_indices = @transform_2, window_bounds = array<i64: 2, 32>}, {transform_indices = @transform_3, window_bounds = array<i64: 1, 32, 256>}]} {
    %c0 = arith.constant 0 : index
    %c0_0 = arith.constant 0 : index
    %c0_1 = arith.constant 0 : index
    %0 = vector.load %arg1[%c0, %c0_0, %c0_1] : memref<1x32x256xf32, #tpu.memory_space<vmem>>, vector<1x32x256xf32>
    %cst = arith.constant dense<0.000000e+00> : vector<1x32xf32>
    %1 = vector.multi_reduction <add>, %0, %cst [2] : vector<1x32x256xf32> to vector<1x32xf32>
    %cst_2 = arith.constant 3.906250e-03 : f32
    %2 = vector.broadcast %cst_2 : f32 to vector<1x32xf32>
    %3 = arith.mulf %1, %2 : vector<1x32xf32>
    %cst_3 = arith.constant dense<0xFF800000> : vector<1x32xf32>
    %4 = vector.multi_reduction <maximumf>, %0, %cst_3 [2] : vector<1x32x256xf32> to vector<1x32xf32>
    %c0_4 = arith.constant 0 : index
    %c0_5 = arith.constant 0 : index
    %5 = vector.load %arg2[%c0_4, %c0_5] : memref<32x2xf32, #tpu.memory_space<vmem>>, vector<32x2xf32>
    %c0_6 = arith.constant 0 : index
    %c0_7 = arith.constant 0 : index
    %6 = vector.load %arg3[%c0_6, %c0_7] : memref<2x32xf32, #tpu.memory_space<vmem>>, vector<2x32xf32>
    %cst_8 = arith.constant dense<0.000000e+00> : vector<1x2xf32>
    %7 = tpu.matmul %3, %5, %cst_8 {dimension_numbers = #tpu.dot_dimension_numbers<[1], [0], [0], [1], [0, 0, 1, 1], [], []>} : vector<1x32xf32>, vector<32x2xf32>, vector<1x2xf32> -> vector<1x2xf32>
    %cst_9 = arith.constant 0.000000e+00 : f32
    %8 = vector.broadcast %cst_9 : f32 to vector<1x2xf32>
    %9 = arith.cmpf ogt, %7, %8 : vector<1x2xf32>
    %cst_10 = arith.constant 0.00999999977 : f32
    %10 = vector.broadcast %cst_10 : f32 to vector<1x2xf32>
    %11 = arith.mulf %10, %7 : vector<1x2xf32>
    %12 = arith.select %9, %7, %11 : vector<1x2xi1>, vector<1x2xf32>
    %cst_11 = arith.constant dense<0.000000e+00> : vector<1x32xf32>
    %13 = tpu.matmul %12, %6, %cst_11 {dimension_numbers = #tpu.dot_dimension_numbers<[1], [0], [0], [1], [0, 0, 1, 1], [], []>} : vector<1x2xf32>, vector<2x32xf32>, vector<1x32xf32> -> vector<1x32xf32>
    %cst_12 = arith.constant dense<0.000000e+00> : vector<1x2xf32>
    %14 = tpu.matmul %4, %5, %cst_12 {dimension_numbers = #tpu.dot_dimension_numbers<[1], [0], [0], [1], [0, 0, 1, 1], [], []>} : vector<1x32xf32>, vector<32x2xf32>, vector<1x2xf32> -> vector<1x2xf32>
    %cst_13 = arith.constant 0.000000e+00 : f32
    %15 = vector.broadcast %cst_13 : f32 to vector<1x2xf32>
    %16 = arith.cmpf ogt, %14, %15 : vector<1x2xf32>
    %cst_14 = arith.constant 0.00999999977 : f32
    %17 = vector.broadcast %cst_14 : f32 to vector<1x2xf32>
    %18 = arith.mulf %17, %14 : vector<1x2xf32>
    %19 = arith.select %16, %14, %18 : vector<1x2xi1>, vector<1x2xf32>
    %cst_15 = arith.constant dense<0.000000e+00> : vector<1x32xf32>
    %20 = tpu.matmul %19, %6, %cst_15 {dimension_numbers = #tpu.dot_dimension_numbers<[1], [0], [0], [1], [0, 0, 1, 1], [], []>} : vector<1x2xf32>, vector<2x32xf32>, vector<1x32xf32> -> vector<1x32xf32>
    %21 = arith.addf %13, %20 : vector<1x32xf32>
    %22 = arith.negf %21 : vector<1x32xf32>
    %23 = math.exp %22 : vector<1x32xf32>
    %cst_16 = arith.constant 1.000000e+00 : f32
    %24 = vector.broadcast %cst_16 : f32 to vector<1x32xf32>
    %25 = arith.addf %24, %23 : vector<1x32xf32>
    %26 = arith.divf %24, %25 : vector<1x32xf32>
    %27 = vector.shape_cast %26 : vector<1x32xf32> to vector<1x32x1xf32>
    %28 = vector.broadcast %27 : vector<1x32x1xf32> to vector<1x32x256xf32>
    %29 = arith.mulf %0, %28 : vector<1x32x256xf32>
    %c0_17 = arith.constant 0 : index
    %c0_18 = arith.constant 0 : index
    %c0_19 = arith.constant 0 : index
    %30 = vector.load %arg4[%c0_17, %c0_18, %c0_19] : memref<1x32x256xf32, #tpu.memory_space<vmem>>, vector<1x32x256xf32>
    tpu.vector_store %arg4[%c0_17, %c0_18, %c0_19], %29 {strides = array<i32>} : memref<1x32x256xf32, #tpu.memory_space<vmem>>, vector<1x32x256xf32>,
    return
  }
  func.func @transform_0(%arg0: i32) -> (i32, i32, i32) {
    %c0_i32 = arith.constant 0 : i32
    %c0_i32_0 = arith.constant 0 : i32
    %c0_i32_1 = arith.constant 0 : i32
    return %arg0, %c0_i32, %c0_i32_0 : i32, i32, i32
  }
  func.func @transform_1(%arg0: i32) -> (i32, i32) {
    %c0_i32 = arith.constant 0 : i32
    %c0_i32_0 = arith.constant 0 : i32
    %c0_i32_1 = arith.constant 0 : i32
    return %c0_i32, %c0_i32_0 : i32, i32
  }
  func.func @transform_2(%arg0: i32) -> (i32, i32) {
    %c0_i32 = arith.constant 0 : i32
    %c0_i32_0 = arith.constant 0 : i32
    %c0_i32_1 = arith.constant 0 : i32
    return %c0_i32, %c0_i32_0 : i32, i32
  }
  func.func @transform_3(%arg0: i32) -> (i32, i32, i32) {
    %c0_i32 = arith.constant 0 : i32
    %c0_i32_0 = arith.constant 0 : i32
    %c0_i32_1 = arith.constant 0 : i32
    return %arg0, %c0_i32, %c0_i32_0 : i32, i32, i32
  }
}

</mosaic_0001>

<llo_original>
// kernel: tpu_custom_call.1
$region0: #{tpu_custom_call.1}
  #allocation0 [shape = 'u32[]', space=smem, size = 0x4, offset = 0x4, fixed_abs, tag = 'smem constant byte address 0x4 - core index']
  #allocation1 [shape = 'u32[72,128]{1,0:T(1,128)}', space=vmem, size = 0x9000, scoped, tag = 'internal scratch']
  %s0 = inlined_call_operand.hbm [shape: f32[2,32,256], index: 0, kind: input, shape index: {}]
  %s1 = inlined_call_operand.vmem [shape: f32[32,2], index: 1, kind: input, shape index: {}]
  %s2 = inlined_call_operand.vmem [shape: f32[2,32], index: 2, kind: input, shape index: {}]
  %s3 = inlined_call_operand.hbm [shape: f32[2,32,256], index: 3, kind: output, shape index: {}]
  %s4 = sld [smem:[#allocation0]]
  $region49: #{tpu_custom_call.1} parent=0
    _
  %s6 = ssub.s32 1, %s4
  %s7 = scalar_select 0, %s6, %s4
  $region1: #{tpu_custom_call.1} parent=0
    #allocation2 [shape = 'u8[65536]{0}', space=vmem, size = 0x10000, scoped, tag = 'input window, operand 0']
    #allocation3 [shape = 's32[2]{0}', space=sflag, size = 0x8, scoped, tag = 'scoped memory for tpu_custom_call.1']
    #allocation4 [shape = 's32[2]{0}', space=sflag, size = 0x8, scoped, tag = 'scoped memory for tpu_custom_call.1']
    #allocation5 [shape = 'u8[65536]{0}', space=vmem, size = 0x10000, scoped, tag = 'output window, operand 0']
    %8 = vsyncpa [#allocation3], 0
    %s9 = scalar_lea.sflag [#allocation3], 1
    %10 = vsyncpa %s9, 0
    %11 = vsyncpa [#allocation4], 0
    %s12 = scalar_lea.sflag [#allocation4], 1
    %13 = vsyncpa %s12, 0
    loop: start=0, step=1, limit=4
    $region2: #{tpu_custom_call.1} parent=1 // loop_pre_header
      _
    $region3: #{tpu_custom_call.1} parent=1 // loop_header
      %s15 = sphi 0, %s19
      %p16 = scmp.ge.s32.totalorder %s15, 4
      %s25 = sphi 0, %s27
      %s28 = sphi 0, %s25
      %s29 = sphi 0, %s28
      %s45 = sphi 0, %s29
      %s49 = sphi 0, %s49
      %s51 = sphi 0, %s49
      %s52 = sphi 0, %s51
      %s66 = sphi 0, %s52
      %s70 = sphi 0, %s70
      %s72 = sphi 0, %s70
      %s73 = sphi 0, %s72
      %s87 = sphi 0, %s73
      %s93 = sphi 0, %s95
      %s96 = sphi 0, %s93
      %s97 = sphi 0, %s96
      %s113 = sphi 0, %s97
    $region4: #{tpu_custom_call.1} parent=1 // loop_header_branch
      %18 = sbr.rel (%p16) target = $region8
    $region5: #{tpu_custom_call.1} parent=1 // loop_body
      %s20 = ssub.s32 %s15, 1
      %s21 = ssub.s32 %s15, 2
      %s22 = sadd.s32 %s15, 1
      %s23 = ssub.s32 %s15, %s22
      %p24 = scmp.eq.s32.totalorder %s23, 0
      %s26 = sadd.s32 %s25, 1
      %s27 = scalar_select %p24, %s25, %s26
      %p30 = pneg %p24
      %p31 = scmp.eq.s32.totalorder %s15, 1
      %p32 = por %p30, %p31
      %p33 = scmp.ne.s32.totalorder %s25, %s28
      %p34 = scmp.eq.s32.totalorder %s15, 0
      %p35 = por %p33, %p34
      %p36 = scmp.ne.s32.totalorder %s25, %s28
      %p37 = scmp.eq.s32.totalorder %s20, 1
      %p38 = por %p36, %p37
      %p39 = scmp.ne.s32.totalorder %s28, %s29
      %p40 = scmp.eq.s32.totalorder %s20, 0
      %p41 = por %p39, %p40
      %p42 = scmp.ne.s32.totalorder %s28, %s29
      %p43 = scmp.eq.s32.totalorder %s21, 1
      %p44 = por %p42, %p43
      %p46 = scmp.ne.s32.totalorder %s29, %s45
      %p47 = scmp.eq.s32.totalorder %s21, 0
      %p48 = por %p46, %p47
      %s50 = sadd.s32 %s49, 1
      %p53 = scmp.eq.s32.totalorder %s15, 1
      %p54 = scmp.ne.s32.totalorder %s49, %s51
      %p55 = scmp.eq.s32.totalorder %s15, 0
      %p56 = por %p54, %p55
      %p57 = scmp.ne.s32.totalorder %s49, %s51
      %p58 = scmp.eq.s32.totalorder %s20, 1
      %p59 = por %p57, %p58
      %p60 = scmp.ne.s32.totalorder %s51, %s52
      %p61 = scmp.eq.s32.totalorder %s20, 0
      %p62 = por %p60, %p61
      %p63 = scmp.ne.s32.totalorder %s51, %s52
      %p64 = scmp.eq.s32.totalorder %s21, 1
      %p65 = por %p63, %p64
      %p67 = scmp.ne.s32.totalorder %s52, %s66
      %p68 = scmp.eq.s32.totalorder %s21, 0
      %p69 = por %p67, %p68
      %s71 = sadd.s32 %s70, 1
      %p74 = scmp.eq.s32.totalorder %s15, 1
      %p75 = scmp.ne.s32.totalorder %s70, %s72
      %p76 = scmp.eq.s32.totalorder %s15, 0
      %p77 = por %p75, %p76
      %p78 = scmp.ne.s32.totalorder %s70, %s72
      %p79 = scmp.eq.s32.totalorder %s20, 1
      %p80 = por %p78, %p79
      %p81 = scmp.ne.s32.totalorder %s72, %s73
      %p82 = scmp.eq.s32.totalorder %s20, 0
      %p83 = por %p81, %p82
      %p84 = scmp.ne.s32.totalorder %s72, %s73
      %p85 = scmp.eq.s32.totalorder %s21, 1
      %p86 = por %p84, %p85
      %p88 = scmp.ne.s32.totalorder %s73, %s87
      %p89 = scmp.eq.s32.totalorder %s21, 0
      %p90 = por %p88, %p89
      %s91 = ssub.s32 %s15, %s22
      %p92 = scmp.eq.s32.totalorder %s91, 0
      %s94 = sadd.s32 %s93, 1
      %s95 = scalar_select %p92, %s93, %s94
      %p98 = pneg %p92
      %p99 = scmp.eq.s32.totalorder %s15, 1
      %p100 = por %p98, %p99
      %p101 = scmp.ne.s32.totalorder %s93, %s96
      %p102 = scmp.eq.s32.totalorder %s15, 0
      %p103 = por %p101, %p102
      %p104 = scmp.ne.s32.totalorder %s93, %s96
      %p105 = scmp.eq.s32.totalorder %s20, 1
      %p106 = por %p104, %p105
      %p107 = scmp.ne.s32.totalorder %s96, %s97
      %p108 = scmp.eq.s32.totalorder %s20, 0
      %p109 = por %p107, %p108
      %p110 = scmp.ne.s32.totalorder %s96, %s97
      %p111 = scmp.eq.s32.totalorder %s21, 1
      %p112 = por %p110, %p111
      %p114 = scmp.ne.s32.totalorder %s97, %s113
      %p115 = scmp.eq.s32.totalorder %s21, 0
      %p116 = por %p114, %p115
      %p117 = scmp.le.s32.totalorder 1, %s15
      %p118 = scmp.lt.s32.totalorder %s15, 3
      %p119 = pnand %p117, %p118
      %p120 = pneg %p119
      // Predicated region
      $region9: #{tpu_custom_call.1} parent=5 // pred_check
        _
      $region10: #{tpu_custom_call.1} parent=5 // pred_check_branch
        %122 = sbr.rel (%p119) target = $region12
      $region11: #{tpu_custom_call.1} parent=5 // pred_region
        %s123 = ssub.s32 %s15, 1
        // Predicated region
        $region13: #{tpu_custom_call.1} parent=11 // pred_check
          %p124 = pneg %p62
        $region14: #{tpu_custom_call.1} parent=11 // pred_check_branch
          %126 = sbr.rel (%p124) target = $region16
        $region15: #{tpu_custom_call.1} parent=11 // pred_region
          _
        $region16: #{tpu_custom_call.1} parent=11 // pred_fallthru
          _
        // Predicated region
        $region17: #{tpu_custom_call.1} parent=11 // pred_check
          %p127 = pneg %p83
        $region18: #{tpu_custom_call.1} parent=11 // pred_check_branch
          %129 = sbr.rel (%p127) target = $region20
        $region19: #{tpu_custom_call.1} parent=11 // pred_region
          _
        $region20: #{tpu_custom_call.1} parent=11 // pred_fallthru
          _
      $region12: #{tpu_custom_call.1} parent=5 // pred_fallthru
        _
      %p130 = scmp.lt.s32.totalorder %s15, 2
      // Predicated region
      $region21: #{tpu_custom_call.1} parent=5 // pred_check
        %p131 = pneg %p130
      $region22: #{tpu_custom_call.1} parent=5 // pred_check_branch
        %133 = sbr.rel (%p131) target = $region24
      $region23: #{tpu_custom_call.1} parent=5 // pred_region
        // Predicated region
        $region25: #{tpu_custom_call.1} parent=23 // pred_check
          %p134 = pneg %p35
        $region26: #{tpu_custom_call.1} parent=23 // pred_check_branch
          %136 = sbr.rel (%p134) target = $region28
        $region27: #{tpu_custom_call.1} parent=23 // pred_region
          %s137 = sand.u32 %s25, 1
          %s138 = scalar_lea.sflag [#allocation3], %s137
          %s139 = sand.u32 %s25, 1
          %s140 = smul.addr %s139, 64
          %s141 = scalar_lea.vmem [#allocation2], %s140
          %143 = vsyncadd %s138, 0
          %s144 = smul.addr %s15, 8
          %s145 = smul.addr %s144, 8
          %s146 = scalar_lea.hbm %s0, %s145
          %s147 = sshll.u32 %s146, 4
          %s148 = int_to_ptr.hbm [resolvable:$true] %s147
          %s149 = sshll.u32 %s141, 4
          %s150 = int_to_ptr.vmem [resolvable:$true] %s149
          %155 = dma.hbm_to_vmem [thread:$0]  %s148, 1024, %s150, %s138, 256, 256, 16
        $region28: #{tpu_custom_call.1} parent=23 // pred_fallthru
          _
      $region24: #{tpu_custom_call.1} parent=5 // pred_fallthru
        _
      %p156 = scmp.le.s32.totalorder 1, %s15
      %p157 = scmp.lt.s32.totalorder %s15, 3
      %p158 = pnand %p156, %p157
      %p159 = pneg %p158
      // Predicated region
      $region29: #{tpu_custom_call.1} parent=5 // pred_check
        _
      $region30: #{tpu_custom_call.1} parent=5 // pred_check_branch
        %161 = sbr.rel (%p158) target = $region32
      $region31: #{tpu_custom_call.1} parent=5 // pred_region
        %s162 = ssub.s32 %s15, 1
        %s163 = sand.u32 %s28, 1
        %s164 = scalar_lea.sflag [#allocation3], %s163
        %s165 = sand.u32 %s28, 1
        %s166 = smul.addr %s165, 64
        %s167 = scalar_lea.vmem [#allocation2], %s166
        // Predicated region
        $region33: #{tpu_custom_call.1} parent=31 // pred_check
          %p168 = pneg %p41
        $region34: #{tpu_custom_call.1} parent=31 // pred_check_branch
          %170 = sbr.rel (%p168) target = $region36
        $region35: #{tpu_custom_call.1} parent=31 // pred_region
          %172 = dma.done %s164, 1024
        $region36: #{tpu_custom_call.1} parent=31 // pred_fallthru
          _
        %s173 = sand.u32 %s28, 1
        %s174 = scalar_lea.sflag [#allocation3], %s173
        %s175 = sand.u32 %s28, 1
        %s176 = smul.addr %s175, 64
        %s177 = scalar_lea.vmem [#allocation2], %s176
        %p178 = pneg %p41
        %p179 = pneg %p38
        %p180 = pneg %p62
        %p181 = pneg %p59
        %p182 = pneg %p83
        %p183 = pneg %p80
        %p184 = pneg %p109
        %p185 = pneg %p106
        %s186 = sand.u32 %s96, 1
        %s187 = scalar_lea.sflag [#allocation4], %s186
        %s188 = sand.u32 %s96, 1
        %s189 = smul.addr %s188, 64
        %s190 = scalar_lea.vmem [#allocation5], %s189
        %v191 = vld [vmem:[%s167] sm:$0xff]
        %v192 = vld [vmem:[%s167 + $0x8] sm:$0xff]
        %v193 = vld [vmem:[%s167 + $0x10] sm:$0xff]
        %v194 = vld [vmem:[%s167 + $0x18] sm:$0xff]
        %v195 = vld [vmem:[%s167 + $0x20] sm:$0xff]
        %v196 = vld [vmem:[%s167 + $0x28] sm:$0xff]
        %v197 = vld [vmem:[%s167 + $0x30] sm:$0xff]
        %v198 = vld [vmem:[%s167 + $0x38] sm:$0xff]
        %v199 = vadd.f32 %v191, %v192
        %200 = vadd.xlane.f32.xlu0 %v199
        %v201 = vpop.xlane.xlu0 %200
        %v202 = vadd.f32 %v193, %v194
        %203 = vadd.xlane.f32.xlu0 %v202
        %v204 = vpop.xlane.xlu0 %203
        %v205 = vadd.f32 %v195, %v196
        %206 = vadd.xlane.f32.xlu0 %v205
        %v207 = vpop.xlane.xlu0 %206
        %v208 = vadd.f32 %v197, %v198
        %209 = vadd.xlane.f32.xlu0 %v208
        %v210 = vpop.xlane.xlu0 %209
        %v211 = vmul.f32 %v201, 0.00390625
        %v212 = vmul.f32 %v204, 0.00390625
        %v213 = vmul.f32 %v207, 0.00390625
        %v214 = vmul.f32 %v210, 0.00390625
        %v215 = vmax.f32 %v191, %v192
        %216 = vmax.xlane.f32.xlu0 %v215
        %v217 = vpop.xlane.xlu0 %216
        %v218 = vmax.f32 %v193, %v194
        %219 = vmax.xlane.f32.xlu0 %v218
        %v220 = vpop.xlane.xlu0 %219
        %v221 = vmax.f32 %v195, %v196
        %222 = vmax.xlane.f32.xlu0 %v221
        %v223 = vpop.xlane.xlu0 %222
        %v224 = vmax.f32 %v197, %v198
        %225 = vmax.xlane.f32.xlu0 %v224
        %v226 = vpop.xlane.xlu0 %225
        %v227 = vld [vmem:[%s1] sm:$0xff]
        %v228 = vld [vmem:[%s1 + $0x8] sm:$0xff]
        %v229 = vld [vmem:[%s1 + $0x10] sm:$0xff]
        %v230 = vld [vmem:[%s1 + $0x18] sm:$0xff]
        %v231 = vld [vmem:[%s2] sm:$0x3]
        %v236 = vlaneseq
        %v237 = vand.u32 %v236, 127
        %v238 = vperm.slane %v211, %v237
        %v239 = vadd.s32 %v237, 4294967288
        %v240 = vperm.slane %v212, %v239
        %vm241 = vcmask 130112
        %v242 = vsel %vm241, %v240, %v238
        %v243 = vadd.s32 %v237, 4294967280
        %v244 = vperm.slane %v213, %v243
        %vm245 = vcmask 195712
        %v246 = vsel %vm245, %v244, %v242
        %v247 = vadd.s32 %v237, 4294967272
        %v248 = vperm.slane %v214, %v247
        %vm249 = vcmask 261312
        %v250 = vsel %vm249, %v248, %v246
        %vm251 = vcmask 261120
        %v252 = vsel %vm251, %v250, 0
        %254 = vmatpush.msra.mxu0 0.0
        %255 = vmatpush.msra.mxu0 0.0
        %256 = vmatpush.msra.mxu0 0.0
        %257 = vmatpush.msra.mxu0 0.0
        %258 = vmatpush.msra.mxu0 0.0
        %259 = vmatpush.msra.mxu0 0.0
        %260 = vmatpush.msra.mxu0 0.0
        %261 = vmatpush.msra.mxu0 0.0
        %262 = vmatpush.msra.mxu0 0.0
        %263 = vmatpush.msra.mxu0 0.0
        %264 = vmatpush.msra.mxu0 0.0
        %265 = vmatpush.msra.mxu0 0.0
        %266 = vmatpush.msra.mxu0 %v230
        %267 = vmatpush.msra.mxu0 %v229
        %268 = vmatpush.msra.mxu0 %v228
        %269 = vmatpush.msra.mxu0 %v227
        %270 = vmatmul.f32.gmra.mxu0 %v252
        %v271 = vpop.f32.mrf.mxu0
        %v272 = vadd.f32 0.0, %v271
        %273 = vdwg.mxu0
        %vm274 = vcmp.gt.f32.partialorder %v272, 0.0
        %v275 = vmul.f32 %v272, 0.01
        %v276 = vsel %vm274, %v272, %v275
        %v281 = vperm.slane %v217, %v237
        %v282 = vperm.slane %v220, %v239
        %v283 = vsel %vm241, %v282, %v281
        %v284 = vperm.slane %v223, %v243
        %v285 = vsel %vm245, %v284, %v283
        %v286 = vperm.slane %v226, %v247
        %v287 = vsel %vm249, %v286, %v285
        %v288 = vsel %vm251, %v287, 0
        %290 = vmatpush.msra.mxu0 0.0
        %291 = vmatpush.msra.mxu0 0.0
        %292 = vmatpush.msra.mxu0 0.0
        %293 = vmatpush.msra.mxu0 0.0
        %294 = vmatpush.msra.mxu0 0.0
        %295 = vmatpush.msra.mxu0 0.0
        %296 = vmatpush.msra.mxu0 0.0
        %297 = vmatpush.msra.mxu0 0.0
        %298 = vmatpush.msra.mxu0 0.0
        %299 = vmatpush.msra.mxu0 0.0
        %300 = vmatpush.msra.mxu0 0.0
        %301 = vmatpush.msra.mxu0 0.0
        %302 = vmatpush.msra.mxu0 %v230
        %303 = vmatpush.msra.mxu0 %v229
        %304 = vmatpush.msra.mxu0 %v228
        %305 = vmatpush.msra.mxu0 %v227
        %306 = vmatmul.f32.gmra.mxu0 %v288
        %v307 = vpop.f32.mrf.mxu0
        %v308 = vadd.f32 0.0, %v307
        %309 = vdwg.mxu0
        %vm310 = vcmp.gt.f32.partialorder %v308, 0.0
        %v311 = vmul.f32 %v308, 0.01
        %v312 = vsel %vm310, %v308, %v311
        %vm313 = vcmask 15360
        %v315 = vsel %vm313, %v312, 0
        %vm317 = vcmask 1041408
        %v319 = vsel %vm317, %v231, 0
        %321 = vmatpush.msra.mxu0 0.0
        %322 = vmatpush.msra.mxu0 0.0
        %323 = vmatpush.msra.mxu0 0.0
        %324 = vmatpush.msra.mxu0 0.0
        %325 = vmatpush.msra.mxu0 0.0
        %326 = vmatpush.msra.mxu0 0.0
        %327 = vmatpush.msra.mxu0 0.0
        %328 = vmatpush.msra.mxu0 0.0
        %329 = vmatpush.msra.mxu0 0.0
        %330 = vmatpush.msra.mxu0 0.0
        %331 = vmatpush.msra.mxu0 0.0
        %332 = vmatpush.msra.mxu0 0.0
        %333 = vmatpush.msra.mxu0 0.0
        %334 = vmatpush.msra.mxu0 0.0
        %335 = vmatpush.msra.mxu0 0.0
        %336 = vmatpush.msra.mxu0 %v319
        %337 = vmatmul.f32.gmra.mxu0 %v315
        %v338 = vpop.f32.mrf.mxu0
        %v339 = vadd.f32 0.0, %v338
        %340 = vdwg.mxu0
        %v342 = vsel %vm313, %v276, 0
        %344 = vmatpush.msra.mxu0 0.0
        %345 = vmatpush.msra.mxu0 0.0
        %346 = vmatpush.msra.mxu0 0.0
        %347 = vmatpush.msra.mxu0 0.0
        %348 = vmatpush.msra.mxu0 0.0
        %349 = vmatpush.msra.mxu0 0.0
        %350 = vmatpush.msra.mxu0 0.0
        %351 = vmatpush.msra.mxu0 0.0
        %352 = vmatpush.msra.mxu0 0.0
        %353 = vmatpush.msra.mxu0 0.0
        %354 = vmatpush.msra.mxu0 0.0
        %355 = vmatpush.msra.mxu0 0.0
        %356 = vmatpush.msra.mxu0 0.0
        %357 = vmatpush.msra.mxu0 0.0
        %358 = vmatpush.msra.mxu0 0.0
        %359 = vmatpush.msra.mxu0 %v319
        %360 = vmatmul.f32.gmra.mxu0 %v342
        %v361 = vpop.f32.mrf.mxu0
        %v362 = vadd.f32 %v339, %v361
        %363 = vdwg.mxu0
        %v364 = vxor.u32 %v362, 2147483648
        %v365 = vmul.f32 %v364, 1.442695
        %v366 = vpow.pop %v365
        %v367 = vadd.f32 %v366, 1.0
        %v368 = vrcp.pop %v367
        %v369 = vmul.f32 %v367, %v368
        %v370 = vsub.f32 1.0, %v369
        %v371 = vmul.f32 %v368, %v370
        %v372 = vadd.f32 %v368, %v371
        %vm373 = vweird.f32 %v367
        %vm374 = vweird.f32 %v368
        %vm375 = vmor %vm373, %vm374
        %v376 = vsel %vm375, %v368, %v372
        %v377 = vand.u32 2147483647, %v367
        %vm378 = vcmp.eq.f32.partialorder %v377, 8.507059e+37
        %v379 = vand.u32 %v367, 2147483648
        %v380 = vor.u32 1.1754944e-38, %v379
        %v381 = vsel %vm378, %v380, %v376
        %v382 = vmul.f32 1.0, %v381
        %v383 = vperm.slane %v382, 0
        %v384 = vlaneseq
        %v385 = vshrl.u32 %v384, 7
        %387 = vset.pattern.permute.xlu0 %v385
        %388 = vperm.xlu0 %387, %v383
        %v389 = vpop.permute.xlu0 %388
        %v390 = vlaneseq
        %v391 = vshrl.u32 %v390, 7
        %v392 = vadd.s32 %v391, 8
        %393 = vset.pattern.permute.xlu0 %v392
        %394 = vperm.xlu0 %393, %v383
        %v395 = vpop.permute.xlu0 %394
        %v396 = vlaneseq
        %v397 = vshrl.u32 %v396, 7
        %v398 = vadd.s32 %v397, 16
        %399 = vset.pattern.permute.xlu0 %v398
        %400 = vperm.xlu0 %399, %v383
        %v401 = vpop.permute.xlu0 %400
        %v402 = vlaneseq
        %v403 = vshrl.u32 %v402, 7
        %v404 = vadd.s32 %v403, 24
        %405 = vset.pattern.permute.xlu0 %v404
        %406 = vperm.xlu0 %405, %v383
        %v407 = vpop.permute.xlu0 %406
        %v408 = vmul.f32 %v191, %v389
        %v409 = vmul.f32 %v192, %v389
        %v410 = vmul.f32 %v193, %v395
        %v411 = vmul.f32 %v194, %v395
        %v412 = vmul.f32 %v195, %v401
        %v413 = vmul.f32 %v196, %v401
        %v414 = vmul.f32 %v197, %v407
        %v415 = vmul.f32 %v198, %v407
        %416 = vst [vmem:[%s190] sm:$0xff] %v408
        %417 = vst [vmem:[%s190 + $0x8] sm:$0xff] %v409
        %418 = vst [vmem:[%s190 + $0x10] sm:$0xff] %v410
        %419 = vst [vmem:[%s190 + $0x18] sm:$0xff] %v411
        %420 = vst [vmem:[%s190 + $0x20] sm:$0xff] %v412
        %421 = vst [vmem:[%s190 + $0x28] sm:$0xff] %v413
        %422 = vst [vmem:[%s190 + $0x30] sm:$0xff] %v414
        %423 = vst [vmem:[%s190 + $0x38] sm:$0xff] %v415
        %s424 = sand.u32 %s96, 1
        %s425 = scalar_lea.sflag [#allocation4], %s424
        %s426 = sand.u32 %s96, 1
        %s427 = smul.addr %s426, 64
        %s428 = scalar_lea.vmem [#allocation5], %s427
        // Predicated region
        $region37: #{tpu_custom_call.1} parent=31 // pred_check
          %p429 = pneg %p106
        $region38: #{tpu_custom_call.1} parent=31 // pred_check_branch
          %431 = sbr.rel (%p429) target = $region40
        $region39: #{tpu_custom_call.1} parent=31 // pred_region
          %433 = vsyncadd %s425, 0
          %s434 = smul.addr %s20, 8
          %s435 = smul.addr %s434, 8
          %s436 = scalar_lea.hbm %s3, %s435
          %s437 = sshll.u32 %s428, 4
          %s438 = int_to_ptr.vmem [resolvable:$true] %s437
          %s439 = sshll.u32 %s436, 4
          %s440 = int_to_ptr.hbm [resolvable:$true] %s439
          %445 = dma.vmem_to_hbm [thread:$0]  %s438, 1024, %s440, %s425, 256, 256, 16
        $region40: #{tpu_custom_call.1} parent=31 // pred_fallthru
          _
      $region32: #{tpu_custom_call.1} parent=5 // pred_fallthru
        _
      %p446 = scmp.le.s32.totalorder 2, %s15
      // Predicated region
      $region41: #{tpu_custom_call.1} parent=5 // pred_check
        %p447 = pneg %p446
      $region42: #{tpu_custom_call.1} parent=5 // pred_check_branch
        %449 = sbr.rel (%p447) target = $region44
      $region43: #{tpu_custom_call.1} parent=5 // pred_region
        %s450 = ssub.s32 %s15, 2
        // Predicated region
        $region45: #{tpu_custom_call.1} parent=43 // pred_check
          %p451 = pneg %p112
        $region46: #{tpu_custom_call.1} parent=43 // pred_check_branch
          %453 = sbr.rel (%p451) target = $region48
        $region47: #{tpu_custom_call.1} parent=43 // pred_region
          %s454 = sand.u32 %s97, 1
          %s455 = scalar_lea.sflag [#allocation4], %s454
          %s456 = sand.u32 %s97, 1
          %s457 = smul.addr %s456, 64
          %s458 = scalar_lea.vmem [#allocation5], %s457
          %460 = dma.done %s455, 1024
        $region48: #{tpu_custom_call.1} parent=43 // pred_fallthru
          _
      $region44: #{tpu_custom_call.1} parent=5 // pred_fallthru
        _
    $region6: #{tpu_custom_call.1} parent=1 // loop_footer
      %s19 = sadd.s32 1, %s15
    $region7: #{tpu_custom_call.1} parent=1 // loop_footer_branch
      %14 = sbr.rel target = $region3
    $region8: #{tpu_custom_call.1} parent=1 // loop_exit
      _
    %461 = vsyncpa [#allocation3], 1
    %s462 = scalar_lea.sflag [#allocation3], 1
    %463 = vsyncpa %s462, 1
    %464 = vsyncpa [#allocation4], 1
    %s465 = scalar_lea.sflag [#allocation4], 1
    %466 = vsyncpa %s465, 1

</llo_original>
